<compile_context>
chip_gen: v6e
topology: v6e:2x2x1
jax: 0.10.0
libtpu: 0.0.40
codegen_flags: <defaults>
</compile_context>

<pallas_src>
import functools
import math

import jax
import jax.numpy as jnp
import numpy as np
from jax.experimental import pallas as pl
from jax.experimental.pallas import tpu as pltpu

_LANE = 128
_SUBLANE = 8


def _round_up(x, m):
    return ((x + m - 1) // m) * m


def _cdiv(a, b):
    return (a + b - 1) // b


def _is_pow2(x):
    return x >= 2 and (x & (x - 1)) == 0


# --------------------------------------------------------------------------- #
# Kernel
# --------------------------------------------------------------------------- #
def _finish_stats(s1, s2, m):
    """mean / unbiased std (ddof=1) from sum and sum-of-squares over m samples."""
    mean = s1 * (1.0 / m)
    var = (s2 - float(m) * mean * mean) * (1.0 / (m - 1))
    std = jnp.sqrt(jnp.maximum(var, 0.0))      # clamp tiny cancellation residue
    return mean, std


def gim_gaussian_dis_kernel(test_ref, si_ref, w1_ref, b1_ref, w2_ref, b2_ref,
                            w3t_ref, b3_ref, out_ref, cat_ref, *,
                            n, k, D, lane_dense):
    dot_dtype = w1_ref.dtype

    def flat_stats(x_ref, m):
        # x_ref: [TB, m*D] lane-dense.  Butterfly-reduce over the m samples with
        # log2(m) XLU rolls; lanes 0..D-1 end up holding the sum over samples.
        x = x_ref[...]
        if x.dtype != jnp.float32:
            x = x.astype(jnp.float32)
        s1, s2 = x, x * x
        shift = m * D
        for _ in range(int(round(math.log2(m)))):
            shift //= 2
            s1 = s1 + pltpu.roll(s1, shift, 1)
            s2 = s2 + pltpu.roll(s2, shift, 1)
        return _finish_stats(s1[:, :D], s2[:, :D], m)

    def axis_stats(x_ref, m):
        # x_ref: [TB, m, D] (lane-sparse fallback).  One pass over the axis.
        x = x_ref[...]
        if x.dtype != jnp.float32:
            x = x.astype(jnp.float32)
        return _finish_stats(jnp.sum(x, axis=1), jnp.sum(x * x, axis=1), m)

    stats = flat_stats if lane_dense else axis_stats
    mt, st = stats(test_ref, n)                    # test stats
    ms, ss = stats(si_ref, k)                      # si stats

    # cat([mt, st, ms, ss], -1) realised as static-offset stores into a
    # [TB, 4D] scratch -> a single K=4D matmul feeds the MXU.
    cat_ref[:, 0 * D:1 * D] = mt.astype(dot_dtype)
    cat_ref[:, 1 * D:2 * D] = st.astype(dot_dtype)
    cat_ref[:, 2 * D:3 * D] = ms.astype(dot_dtype)
    cat_ref[:, 3 * D:4 * D] = ss.astype(dot_dtype)

    h1 = jnp.dot(cat_ref[...], w1_ref[...], preferred_element_type=jnp.float32)
    h1 = jnp.maximum(h1 + b1_ref[...], 0.0)                       # [TB, D]
    if h1.dtype != dot_dtype:
        h1 = h1.astype(dot_dtype)

    h2 = jnp.dot(h1, w2_ref[...], preferred_element_type=jnp.float32)
    h2 = jnp.maximum(h2 + b2_ref[...], 0.0)                       # [TB, 2D]

    # N=1 output projection: VPU multiply + XLU lane reduction (no MXU); scalar
    # bias read from SMEM.
    out_ref[...] = (jnp.sum(h2 * w3t_ref[...], axis=-1, keepdims=True)
                    + b3_ref[0, 0])                               # [TB, 1]


# --------------------------------------------------------------------------- #
# Cost / VMEM budgeting / tile selection
# --------------------------------------------------------------------------- #
def _cost_estimate(B, n, k, D):
    h_in, h1, h2 = 4 * D, D, 2 * D
    flops = int(B * (n + k) * D * 3                 # square + tree-add passes
                + 2 * B * h_in * h1                 # W1 matmul
                + 2 * B * h1 * h2                   # W2 matmul
                + 2 * B * h2                        # final projection
                + 10 * B * D)                       # stat epilogue
    transcendentals = int(2 * B * D)                # sqrt per std element
    bytes_accessed = int(4 * (B * (n + k) * D
                              + h_in * h1 + h1 + h1 * h2 + h2 + h2 + 1
                              + B))
    return pl.CostEstimate(flops=flops, transcendentals=transcendentals,
                           bytes_accessed=bytes_accessed)


def _vmem_budget_bytes():
    cap = 128 * 1024 * 1024
    try:
        cap = int(getattr(pltpu.get_tpu_info(), "vmem_capacity_bytes", cap))
    except Exception:
        pass
    # Never request all of VMEM (compiler scratch / spills need headroom):
    # v7x (64 MiB/TC) -> 48 MiB budget; v5e/v6e (128 MiB) -> capped at 64 MiB.
    return min(cap * 3 // 4, 64 * 1024 * 1024)


def _per_row_and_fixed_bytes(n, k, D, in_itemsize, dot_itemsize, lane_dense,
                             sample_buffers):
    if lane_dense:
        lanes = _round_up(n * D, _LANE) + _round_up(k * D, _LANE)
    else:
        lanes = (_round_up(n, _SUBLANE) + _round_up(k, _SUBLANE)) * _round_up(D, _LANE)
    stream_row = in_itemsize * lanes                # streamed sample tiles (padded)
    temps_row = 2 * 4 * lanes                       # f32 s1/s2 reduction temps
    cat_row = dot_itemsize * _round_up(4 * D, _LANE)
    interm_row = 4 * (_round_up(D, _LANE) + _round_up(2 * D, _LANE))   # h1, h2
    out_row = 2 * 4 * _LANE                         # (TB,1) block, 2 bufs, lane pad
    per_row = sample_buffers * stream_row + temps_row + cat_row + interm_row + out_row

    def _w(r, c, itemsize):
        return _round_up(r, _SUBLANE) * _round_up(c, _LANE) * itemsize

    fixed = 2 * (_w(4 * D, D, dot_itemsize) + _w(D, 2 * D, dot_itemsize)
                 + _w(1, D, 4) + 2 * _w(1, 2 * D, 4))
    fixed += 2 * 1024 * 1024                        # compiler slack
    return per_row, fixed


# --------------------------------------------------------------------------- #
# Wrapper
# --------------------------------------------------------------------------- #
def gim_gaussian_dis(test_sample, si_sample, params, *, batch_tile=None,
                     dot_dtype=jnp.float32):
    """test_sample: [B, n, D], si_sample: [B, k, D] -> [B, 1] float32."""
    B, n, D = test_sample.shape
    Bk, k, Dk = si_sample.shape
    assert Bk == B and Dk == D
    assert n >= 2 and k >= 2, "unbiased std (ddof=1) needs >= 2 samples"

    w1, b1, w2, b2, w3, b3 = params
    H1, H2 = w1.shape[1], w2.shape[1]               # D, 2*D
    dot_dtype = jnp.dtype(dot_dtype)

    # Pre-cast matmul weights once on the host; VPU-path params stay f32.
    w1c = w1.astype(dot_dtype)
    w2c = w2.astype(dot_dtype)
    b1f = b1.reshape(1, H1).astype(jnp.float32)
    b2f = b2.reshape(1, H2).astype(jnp.float32)
    w3t = w3.reshape(H2, 1).T.astype(jnp.float32)   # [1, 2D] row (VPU projection)
    b3s = jnp.asarray(b3, jnp.float32).reshape(1, 1)

    # Lane-dense streaming: collapse [B, m, D] -> [B, m*D] (free for contiguous
    # trailing dims) so sample blocks are 128-lane dense instead of D-of-128
    # sparse.  Requires power-of-two sample counts for the roll reduction.
    lane_dense = _is_pow2(n) and _is_pow2(k)
    if lane_dense:
        test_in = test_sample.reshape(B, n * D)
        si_in = si_sample.reshape(B, k * D)
    else:
        test_in, si_in = test_sample, si_sample

    in_itemsize = jnp.dtype(test_sample.dtype).itemsize
    budget = _vmem_budget_bytes()
    can_buffer = hasattr(pl, "Buffered")
    sample_buffers = 3 if can_buffer else 2
    per_row, fixed = _per_row_and_fixed_bytes(
        n, k, D, in_itemsize, dot_dtype.itemsize, lane_dense, sample_buffers)

    if batch_tile is None:
        tb_fit = max(_SUBLANE, ((budget - fixed) // per_row) // _SUBLANE * _SUBLANE)
        # >= 2 grid steps when possible so both v7x TensorCores get work; the
        # extra step costs ~0.35us on single-TC chips (negligible, mem-bound).
        tb_split = _round_up(max(_cdiv(B, 2), 1), _SUBLANE)
        TB = int(max(_SUBLANE, min(tb_fit, tb_split, 4096)))
    else:
        TB = int(max(_SUBLANE, _round_up(batch_tile, _SUBLANE)))
    num_steps = _cdiv(B, TB)                        # partial last block allowed
    grid = (num_steps,)

    use_buffered = can_buffer and num_steps >= 3

    def sample_spec(shape, index_map):
        if use_buffered:
            return pl.BlockSpec(shape, index_map, pipeline_mode=pl.Buffered(3))
        return pl.BlockSpec(shape, index_map)

    if lane_dense:
        test_spec = sample_spec((TB, n * D), lambda i: (i, 0))
        si_spec = sample_spec((TB, k * D), lambda i: (i, 0))
    else:
        test_spec = sample_spec((TB, n, D), lambda i: (i, 0, 0))
        si_spec = sample_spec((TB, k, D), lambda i: (i, 0, 0))

    in_specs = [
        test_spec,
        si_spec,
        pl.BlockSpec((4 * D, H1), lambda i: (0, 0)),       # W1 (VMEM-resident)
        pl.BlockSpec((1, H1), lambda i: (0, 0)),           # b1
        pl.BlockSpec((H1, H2), lambda i: (0, 0)),          # W2
        pl.BlockSpec((1, H2), lambda i: (0, 0)),           # b2
        pl.BlockSpec((1, H2), lambda i: (0, 0)),           # W3^T row
        pl.BlockSpec((1, 1), lambda i: (0, 0),
                     memory_space=pltpu.MemorySpace.SMEM),  # b3 scalar
    ]

    needed = fixed + TB * per_row
    vmem_limit = int(min(budget, max(needed + 4 * 1024 * 1024, 32 * 1024 * 1024)))

    out = pl.pallas_call(
        functools.partial(gim_gaussian_dis_kernel, n=n, k=k, D=D,
                          lane_dense=lane_dense),
        out_shape=jax.ShapeDtypeStruct((B, 1), jnp.float32),
        grid=grid,
        in_specs=in_specs,
        out_specs=pl.BlockSpec((TB, 1), lambda i: (i, 0)),
        scratch_shapes=[pltpu.VMEM((TB, 4 * D), dot_dtype)],
        compiler_params=pltpu.CompilerParams(
            dimension_semantics=("parallel",),
            vmem_limit_bytes=vmem_limit),
        cost_estimate=_cost_estimate(B, n, k, D),
    )(test_in, si_in, w1c, b1f, w2c, b2f, w3t, b3s)
    return out


# --------------------------------------------------------------------------- #
# Reference / init
# --------------------------------------------------------------------------- #
def init_params(key, src_dim, n_stats=2):
    """Deterministic kaiming-normal init for MLP((n_stats*src_dim*2, D, 2D, 1))."""
    dims = (n_stats * src_dim * 2, src_dim, 2 * src_dim, 1)
    keys = jax.random.split(key, len(dims) - 1)
    params = []
    for i, kk in enumerate(keys):
        fan_in, fan_out = dims[i], dims[i + 1]
        std = np.sqrt(2.0 / fan_in)                 # kaiming (relu gain)
        w = jax.random.normal(kk, (fan_in, fan_out), jnp.float32) * std
        b = jnp.zeros((1, fan_out), jnp.float32)
        params += [w, b]
    return tuple(params)


def reference_forward(test_sample, si_sample, params):
    """Pure-JAX reference of the same forward pass."""
    def stat(x):
        mean = jnp.mean(x, axis=1)
        std = jnp.std(x, axis=1, ddof=1)
        return jnp.concatenate([mean, std], axis=-1)

    w1, b1, w2, b2, w3, b3 = params
    x = jnp.concatenate([stat(test_sample), stat(si_sample)], axis=-1)
    x = jnp.maximum(x @ w1 + b1, 0.0)
    x = jnp.maximum(x @ w2 + b2, 0.0)
    return x @ w3 + b3


if __name__ == "__main__":
    B, n, k, D = 2, 8, 8, 32          # batch, test samples, si samples, src_dim

    key = jax.random.PRNGKey(0)
    k_test, k_si, k_params = jax.random.split(key, 3)
    test_sample = jax.random.normal(k_test, (B, n, D), jnp.float32)
    si_sample = jax.random.normal(k_si, (B, k, D), jnp.float32)
    params = init_params(k_params, D)

    out = jax.block_until_ready(gim_gaussian_dis(test_sample, si_sample, params))
    ref = jax.block_until_ready(reference_forward(test_sample, si_sample, params))
    assert out.shape == (B, 1)
    assert np.allclose(np.asarray(out), np.asarray(ref), rtol=1e-5, atol=1e-5)

    # Multi-step grid + partial final block (no host-side padding copy).
    B2 = 20
    t2 = jax.random.normal(jax.random.PRNGKey(1), (B2, n, D), jnp.float32)
    s2 = jax.random.normal(jax.random.PRNGKey(2), (B2, k, D), jnp.float32)
    out2 = jax.block_until_ready(gim_gaussian_dis(t2, s2, params, batch_tile=8))
    ref2 = jax.block_until_ready(reference_forward(t2, s2, params))
    assert out2.shape == (B2, 1)
    assert np.allclose(np.asarray(out2), np.asarray(ref2), rtol=1e-5, atol=1e-5)

    # Non-power-of-two sample counts exercise the 3-D (lane-sparse) fallback.
    B3, n3, k3 = 5, 6, 5
    t3 = jax.random.normal(jax.random.PRNGKey(3), (B3, n3, D), jnp.float32)
    s3 = jax.random.normal(jax.random.PRNGKey(4), (B3, k3, D), jnp.float32)
    out3 = jax.block_until_ready(gim_gaussian_dis(t3, s3, params))
    ref3 = jax.block_until_ready(reference_forward(t3, s3, params))
    assert out3.shape == (B3, 1)
    assert np.allclose(np.asarray(out3), np.asarray(ref3), rtol=1e-5, atol=1e-5)

    print("KERNEL_OK")
</pallas_src>

<mosaic_0001>
module attributes {stable_mosaic.version = 11 : i64} {
  func.func @gim_gaussian_dis_kernel(%arg0: i32, %arg1: memref<8x256xf32, #tpu.memory_space<vmem>>, %arg2: memref<8x256xf32, #tpu.memory_space<vmem>>, %arg3: memref<128x32xf32, #tpu.memory_space<vmem>>, %arg4: memref<1x32xf32, #tpu.memory_space<vmem>>, %arg5: memref<32x64xf32, #tpu.memory_space<vmem>>, %arg6: memref<1x64xf32, #tpu.memory_space<vmem>>, %arg7: memref<1x64xf32, #tpu.memory_space<vmem>>, %arg8: memref<1x1xf32, #tpu.memory_space<smem>>, %arg9: memref<8x1xf32, #tpu.memory_space<vmem>>, %arg10: memref<8x128xf32, #tpu.memory_space<vmem>>) attributes {dimension_semantics = [#tpu.dimension_semantics<parallel>], iteration_bounds = array<i64: 1>, scalar_prefetch = 0 : i64, scratch_operands = 1 : i64, tpu.core_type = #tpu.core_type<tc>, window_params = [{transform_indices = @transform_0, window_bounds = array<i64: 8, 256>}, {transform_indices = @transform_1, window_bounds = array<i64: 8, 256>}, {pipeline_mode = #tpu.pipeline_mode<synchronous>, transform_indices = @transform_2, window_bounds = array<i64: 128, 32>}, {pipeline_mode = #tpu.pipeline_mode<synchronous>, transform_indices = @transform_3, window_bounds = array<i64: 1, 32>}, {pipeline_mode = #tpu.pipeline_mode<synchronous>, transform_indices = @transform_4, window_bounds = array<i64: 32, 64>}, {pipeline_mode = #tpu.pipeline_mode<synchronous>, transform_indices = @transform_5, window_bounds = array<i64: 1, 64>}, {pipeline_mode = #tpu.pipeline_mode<synchronous>, transform_indices = @transform_6, window_bounds = array<i64: 1, 64>}, {transform_indices = @transform_7, window_bounds = array<i64: 1, 1>}, {transform_indices = @transform_8, window_bounds = array<i64: 8, 1>}]} {
    %c0 = arith.constant 0 : index
    %c0_0 = arith.constant 0 : index
    %0 = vector.load %arg1[%c0, %c0_0] : memref<8x256xf32, #tpu.memory_space<vmem>>, vector<8x256xf32>
    %1 = arith.mulf %0, %0 : vector<8x256xf32>
    %c128_i32 = arith.constant 128 : i32
    %2 = tpu.dynamic_rotate %0 by %c128_i32 dim 1 : vector<8x256xf32>, i32 -> vector<8x256xf32>
    %3 = arith.addf %0, %2 : vector<8x256xf32>
    %c128_i32_1 = arith.constant 128 : i32
    %4 = tpu.dynamic_rotate %1 by %c128_i32_1 dim 1 : vector<8x256xf32>, i32 -> vector<8x256xf32>
    %5 = arith.addf %1, %4 : vector<8x256xf32>
    %c64_i32 = arith.constant 64 : i32
    %6 = tpu.dynamic_rotate %3 by %c64_i32 dim 1 : vector<8x256xf32>, i32 -> vector<8x256xf32>
    %7 = arith.addf %3, %6 : vector<8x256xf32>
    %c64_i32_2 = arith.constant 64 : i32
    %8 = tpu.dynamic_rotate %5 by %c64_i32_2 dim 1 : vector<8x256xf32>, i32 -> vector<8x256xf32>
    %9 = arith.addf %5, %8 : vector<8x256xf32>
    %c32_i32 = arith.constant 32 : i32
    %10 = tpu.dynamic_rotate %7 by %c32_i32 dim 1 : vector<8x256xf32>, i32 -> vector<8x256xf32>
    %11 = arith.addf %7, %10 : vector<8x256xf32>
    %c32_i32_3 = arith.constant 32 : i32
    %12 = tpu.dynamic_rotate %9 by %c32_i32_3 dim 1 : vector<8x256xf32>, i32 -> vector<8x256xf32>
    %13 = arith.addf %9, %12 : vector<8x256xf32>
    %14 = vector.extract_strided_slice %11 {offsets = [0, 0], sizes = [8, 32], strides = [1, 1]} : vector<8x256xf32> to vector<8x32xf32>
    %15 = vector.extract_strided_slice %13 {offsets = [0, 0], sizes = [8, 32], strides = [1, 1]} : vector<8x256xf32> to vector<8x32xf32>
    %cst = arith.constant 1.250000e-01 : f32
    %16 = vector.broadcast %cst : f32 to vector<8x32xf32>
    %17 = arith.mulf %14, %16 : vector<8x32xf32>
    %cst_4 = arith.constant 8.000000e+00 : f32
    %18 = vector.broadcast %cst_4 : f32 to vector<8x32xf32>
    %19 = arith.mulf %18, %17 : vector<8x32xf32>
    %20 = arith.mulf %19, %17 : vector<8x32xf32>
    %21 = arith.subf %15, %20 : vector<8x32xf32>
    %cst_5 = arith.constant 0.142857149 : f32
    %22 = vector.broadcast %cst_5 : f32 to vector<8x32xf32>
    %23 = arith.mulf %21, %22 : vector<8x32xf32>
    %cst_6 = arith.constant 0.000000e+00 : f32
    %24 = vector.broadcast %cst_6 : f32 to vector<8x32xf32>
    %25 = arith.maximumf %23, %24 : vector<8x32xf32>
    %26 = math.sqrt %25 : vector<8x32xf32>
    %c0_7 = arith.constant 0 : index
    %c0_8 = arith.constant 0 : index
    %27 = vector.load %arg2[%c0_7, %c0_8] : memref<8x256xf32, #tpu.memory_space<vmem>>, vector<8x256xf32>
    %28 = arith.mulf %27, %27 : vector<8x256xf32>
    %c128_i32_9 = arith.constant 128 : i32
    %29 = tpu.dynamic_rotate %27 by %c128_i32_9 dim 1 : vector<8x256xf32>, i32 -> vector<8x256xf32>
    %30 = arith.addf %27, %29 : vector<8x256xf32>
    %c128_i32_10 = arith.constant 128 : i32
    %31 = tpu.dynamic_rotate %28 by %c128_i32_10 dim 1 : vector<8x256xf32>, i32 -> vector<8x256xf32>
    %32 = arith.addf %28, %31 : vector<8x256xf32>
    %c64_i32_11 = arith.constant 64 : i32
    %33 = tpu.dynamic_rotate %30 by %c64_i32_11 dim 1 : vector<8x256xf32>, i32 -> vector<8x256xf32>
    %34 = arith.addf %30, %33 : vector<8x256xf32>
    %c64_i32_12 = arith.constant 64 : i32
    %35 = tpu.dynamic_rotate %32 by %c64_i32_12 dim 1 : vector<8x256xf32>, i32 -> vector<8x256xf32>
    %36 = arith.addf %32, %35 : vector<8x256xf32>
    %c32_i32_13 = arith.constant 32 : i32
    %37 = tpu.dynamic_rotate %34 by %c32_i32_13 dim 1 : vector<8x256xf32>, i32 -> vector<8x256xf32>
    %38 = arith.addf %34, %37 : vector<8x256xf32>
    %c32_i32_14 = arith.constant 32 : i32
    %39 = tpu.dynamic_rotate %36 by %c32_i32_14 dim 1 : vector<8x256xf32>, i32 -> vector<8x256xf32>
    %40 = arith.addf %36, %39 : vector<8x256xf32>
    %41 = vector.extract_strided_slice %38 {offsets = [0, 0], sizes = [8, 32], strides = [1, 1]} : vector<8x256xf32> to vector<8x32xf32>
    %42 = vector.extract_strided_slice %40 {offsets = [0, 0], sizes = [8, 32], strides = [1, 1]} : vector<8x256xf32> to vector<8x32xf32>
    %cst_15 = arith.constant 1.250000e-01 : f32
    %43 = vector.broadcast %cst_15 : f32 to vector<8x32xf32>
    %44 = arith.mulf %41, %43 : vector<8x32xf32>
    %cst_16 = arith.constant 8.000000e+00 : f32
    %45 = vector.broadcast %cst_16 : f32 to vector<8x32xf32>
    %46 = arith.mulf %45, %44 : vector<8x32xf32>
    %47 = arith.mulf %46, %44 : vector<8x32xf32>
    %48 = arith.subf %42, %47 : vector<8x32xf32>
    %cst_17 = arith.constant 0.142857149 : f32
    %49 = vector.broadcast %cst_17 : f32 to vector<8x32xf32>
    %50 = arith.mulf %48, %49 : vector<8x32xf32>
    %cst_18 = arith.constant 0.000000e+00 : f32
    %51 = vector.broadcast %cst_18 : f32 to vector<8x32xf32>
    %52 = arith.maximumf %50, %51 : vector<8x32xf32>
    %53 = math.sqrt %52 : vector<8x32xf32>
    %c0_19 = arith.constant 0 : index
    %c0_20 = arith.constant 0 : index
    %54 = vector.load %arg10[%c0_19, %c0_20] : memref<8x128xf32, #tpu.memory_space<vmem>>, vector<8x32xf32>
    tpu.vector_store %arg10[%c0_19, %c0_20], %17 {strides = array<i32>} : memref<8x128xf32, #tpu.memory_space<vmem>>, vector<8x32xf32>,
    %c0_21 = arith.constant 0 : index
    %c32 = arith.constant 32 : index
    %55 = vector.load %arg10[%c0_21, %c32] : memref<8x128xf32, #tpu.memory_space<vmem>>, vector<8x32xf32>
    tpu.vector_store %arg10[%c0_21, %c32], %26 {strides = array<i32>} : memref<8x128xf32, #tpu.memory_space<vmem>>, vector<8x32xf32>,
    %c0_22 = arith.constant 0 : index
    %c64 = arith.constant 64 : index
    %56 = vector.load %arg10[%c0_22, %c64] : memref<8x128xf32, #tpu.memory_space<vmem>>, vector<8x32xf32>
    tpu.vector_store %arg10[%c0_22, %c64], %44 {strides = array<i32>} : memref<8x128xf32, #tpu.memory_space<vmem>>, vector<8x32xf32>,
    %c0_23 = arith.constant 0 : index
    %c96 = arith.constant 96 : index
    %57 = vector.load %arg10[%c0_23, %c96] : memref<8x128xf32, #tpu.memory_space<vmem>>, vector<8x32xf32>
    tpu.vector_store %arg10[%c0_23, %c96], %53 {strides = array<i32>} : memref<8x128xf32, #tpu.memory_space<vmem>>, vector<8x32xf32>,
    %c0_24 = arith.constant 0 : index
    %c0_25 = arith.constant 0 : index
    %58 = vector.load %arg10[%c0_24, %c0_25] : memref<8x128xf32, #tpu.memory_space<vmem>>, vector<8x128xf32>
    %c0_26 = arith.constant 0 : index
    %c0_27 = arith.constant 0 : index
    %59 = vector.load %arg3[%c0_26, %c0_27] : memref<128x32xf32, #tpu.memory_space<vmem>>, vector<128x32xf32>
    %cst_28 = arith.constant dense<0.000000e+00> : vector<8x32xf32>
    %60 = tpu.matmul %58, %59, %cst_28 {dimension_numbers = #tpu.dot_dimension_numbers<[1], [0], [0], [1], [0, 0, 1, 1], [], []>} : vector<8x128xf32>, vector<128x32xf32>, vector<8x32xf32> -> vector<8x32xf32>
    %c0_29 = arith.constant 0 : index
    %c0_30 = arith.constant 0 : index
    %61 = vector.load %arg4[%c0_29, %c0_30] : memref<1x32xf32, #tpu.memory_space<vmem>>, vector<1x32xf32>
    %62 = vector.broadcast %61 : vector<1x32xf32> to vector<8x32xf32>
    %63 = arith.addf %60, %62 : vector<8x32xf32>
    %cst_31 = arith.constant 0.000000e+00 : f32
    %64 = vector.broadcast %cst_31 : f32 to vector<8x32xf32>
    %65 = arith.maximumf %63, %64 : vector<8x32xf32>
    %c0_32 = arith.constant 0 : index
    %c0_33 = arith.constant 0 : index
    %66 = vector.load %arg5[%c0_32, %c0_33] : memref<32x64xf32, #tpu.memory_space<vmem>>, vector<32x64xf32>
    %cst_34 = arith.constant dense<0.000000e+00> : vector<8x64xf32>
    %67 = tpu.matmul %65, %66, %cst_34 {dimension_numbers = #tpu.dot_dimension_numbers<[1], [0], [0], [1], [0, 0, 1, 1], [], []>} : vector<8x32xf32>, vector<32x64xf32>, vector<8x64xf32> -> vector<8x64xf32>
    %c0_35 = arith.constant 0 : index
    %c0_36 = arith.constant 0 : index
    %68 = vector.load %arg6[%c0_35, %c0_36] : memref<1x64xf32, #tpu.memory_space<vmem>>, vector<1x64xf32>
    %69 = vector.broadcast %68 : vector<1x64xf32> to vector<8x64xf32>
    %70 = arith.addf %67, %69 : vector<8x64xf32>
    %cst_37 = arith.constant 0.000000e+00 : f32
    %71 = vector.broadcast %cst_37 : f32 to vector<8x64xf32>
    %72 = arith.maximumf %70, %71 : vector<8x64xf32>
    %c0_38 = arith.constant 0 : index
    %c0_39 = arith.constant 0 : index
    %73 = vector.load %arg7[%c0_38, %c0_39] : memref<1x64xf32, #tpu.memory_space<vmem>>, vector<1x64xf32>
    %74 = vector.broadcast %73 : vector<1x64xf32> to vector<8x64xf32>
    %75 = arith.mulf %72, %74 : vector<8x64xf32>
    %cst_40 = arith.constant dense<0.000000e+00> : vector<8xf32>
    %76 = vector.multi_reduction <add>, %75, %cst_40 [1] : vector<8x64xf32> to vector<8xf32>
    %77 = vector.shape_cast %76 : vector<8xf32> to vector<8x1xf32>
    %c0_41 = arith.constant 0 : index
    %c0_42 = arith.constant 0 : index
    %78 = memref.load %arg8[%c0_41, %c0_42] : memref<1x1xf32, #tpu.memory_space<smem>>
    %79 = vector.broadcast %78 : f32 to vector<8x1xf32>
    %80 = arith.addf %77, %79 : vector<8x1xf32>
    %c0_43 = arith.constant 0 : index
    %c0_44 = arith.constant 0 : index
    %81 = vector.load %arg9[%c0_43, %c0_44] : memref<8x1xf32, #tpu.memory_space<vmem>>, vector<8x1xf32>
    tpu.vector_store %arg9[%c0_43, %c0_44], %80 {strides = array<i32>} : memref<8x1xf32, #tpu.memory_space<vmem>>, vector<8x1xf32>,
    return
  }
  func.func @transform_0(%arg0: i32) -> (i32, i32) {
    %c0_i32 = arith.constant 0 : i32
    %c0_i32_0 = arith.constant 0 : i32
    return %arg0, %c0_i32 : i32, i32
  }
  func.func @transform_1(%arg0: i32) -> (i32, i32) {
    %c0_i32 = arith.constant 0 : i32
    %c0_i32_0 = arith.constant 0 : i32
    return %arg0, %c0_i32 : i32, i32
  }
  func.func @transform_2(%arg0: i32) -> (i32, i32) {
    %c0_i32 = arith.constant 0 : i32
    %c0_i32_0 = arith.constant 0 : i32
    %c0_i32_1 = arith.constant 0 : i32
    return %c0_i32, %c0_i32_0 : i32, i32
  }
  func.func @transform_3(%arg0: i32) -> (i32, i32) {
    %c0_i32 = arith.constant 0 : i32
    %c0_i32_0 = arith.constant 0 : i32
    %c0_i32_1 = arith.constant 0 : i32
    return %c0_i32, %c0_i32_0 : i32, i32
  }
  func.func @transform_4(%arg0: i32) -> (i32, i32) {
    %c0_i32 = arith.constant 0 : i32
    %c0_i32_0 = arith.constant 0 : i32
    %c0_i32_1 = arith.constant 0 : i32
    return %c0_i32, %c0_i32_0 : i32, i32
  }
  func.func @transform_5(%arg0: i32) -> (i32, i32) {
    %c0_i32 = arith.constant 0 : i32
    %c0_i32_0 = arith.constant 0 : i32
    %c0_i32_1 = arith.constant 0 : i32
    return %c0_i32, %c0_i32_0 : i32, i32
  }
  func.func @transform_6(%arg0: i32) -> (i32, i32) {
    %c0_i32 = arith.constant 0 : i32
    %c0_i32_0 = arith.constant 0 : i32
    %c0_i32_1 = arith.constant 0 : i32
    return %c0_i32, %c0_i32_0 : i32, i32
  }
  func.func @transform_7(%arg0: i32) -> (i32, i32) {
    %c0_i32 = arith.constant 0 : i32
    %c0_i32_0 = arith.constant 0 : i32
    %c0_i32_1 = arith.constant 0 : i32
    return %c0_i32, %c0_i32_0 : i32, i32
  }
  func.func @transform_8(%arg0: i32) -> (i32, i32) {
    %c0_i32 = arith.constant 0 : i32
    %c0_i32_0 = arith.constant 0 : i32
    return %arg0, %c0_i32 : i32, i32
  }
}

</mosaic_0001>

<llo_original>
// kernel: tpu_custom_call.1
$region0: #{tpu_custom_call.1}
  #allocation0 [shape = 'u32[]', space=smem, size = 0x4, offset = 0x4, fixed_abs, tag = 'smem constant byte address 0x4 - core index']
  #allocation1 [shape = 'u32[144,128]{1,0:T(1,128)}', space=vmem, size = 0x12000, scoped, tag = 'internal scratch']
  #allocation2 [shape = 'f32[8,128]{1,0:T(8,128)}', space=vmem, size = 0x1000, scoped, tag = 'scratch operand']
  #allocation3 [shape = 'f32[1,1]{1,0:T(1,128)S(6)}', space=smem, size = 0x200, scoped, tag = 'scoped memory for tpu_custom_call.1']
  %s0 = inlined_call_operand.vmem [shape: f32[2,256], index: 0, kind: input, shape index: {}]
  %s1 = inlined_call_operand.vmem [shape: f32[2,256], index: 1, kind: input, shape index: {}]
  %s2 = inlined_call_operand.vmem [shape: f32[128,32], index: 2, kind: input, shape index: {}]
  %s3 = inlined_call_operand.vmem [shape: f32[1,32], index: 3, kind: input, shape index: {}]
  %s4 = inlined_call_operand.vmem [shape: f32[32,64], index: 4, kind: input, shape index: {}]
  %s5 = inlined_call_operand.vmem [shape: f32[1,64], index: 5, kind: input, shape index: {}]
  %s6 = inlined_call_operand.vmem [shape: f32[1,64], index: 6, kind: input, shape index: {}]
  %s7 = inlined_call_operand.<no memory space> [shape: f32[1,1], index: 7, kind: input, shape index: {}]
  %s8 = inlined_call_operand.vmem [shape: f32[2,1], index: 8, kind: output, shape index: {}]
  %s9 = sld [smem:[#allocation0]]
  $region72: #{tpu_custom_call.1} parent=0
    _
  %s11 = ssub.s32 1, %s9
  %s12 = scalar_select 0, %s11, %s9
  %13 = sst [smem:[#allocation3]] %s7
  $region1: #{tpu_custom_call.1} parent=0
    #allocation4 [shape = 'u8[4096]{0}', space=vmem, size = 0x1000, scoped, tag = 'output window, operand 0, single buffered']
    // Predicated region
    $region2: #{tpu_custom_call.1} parent=1 // pred_check
      _
    $region3: #{tpu_custom_call.1} parent=1 // pred_check_branch
      %15 = sbr.rel (0) target = $region5
    $region4: #{tpu_custom_call.1} parent=1 // pred_region
      _
    $region5: #{tpu_custom_call.1} parent=1 // pred_fallthru
      _
    // Predicated region
    $region6: #{tpu_custom_call.1} parent=1 // pred_check
      _
    $region7: #{tpu_custom_call.1} parent=1 // pred_check_branch
      %17 = sbr.rel (0) target = $region9
    $region8: #{tpu_custom_call.1} parent=1 // pred_region
      _
    $region9: #{tpu_custom_call.1} parent=1 // pred_fallthru
      _
    // Predicated region
    $region10: #{tpu_custom_call.1} parent=1 // pred_check
      _
    $region11: #{tpu_custom_call.1} parent=1 // pred_check_branch
      %19 = sbr.rel (0) target = $region13
    $region12: #{tpu_custom_call.1} parent=1 // pred_region
      _
    $region13: #{tpu_custom_call.1} parent=1 // pred_fallthru
      _
    // Predicated region
    $region14: #{tpu_custom_call.1} parent=1 // pred_check
      _
    $region15: #{tpu_custom_call.1} parent=1 // pred_check_branch
      %21 = sbr.rel (0) target = $region17
    $region16: #{tpu_custom_call.1} parent=1 // pred_region
      _
    $region17: #{tpu_custom_call.1} parent=1 // pred_fallthru
      _
    // Predicated region
    $region18: #{tpu_custom_call.1} parent=1 // pred_check
      _
    $region19: #{tpu_custom_call.1} parent=1 // pred_check_branch
      %23 = sbr.rel (0) target = $region21
    $region20: #{tpu_custom_call.1} parent=1 // pred_region
      _
    $region21: #{tpu_custom_call.1} parent=1 // pred_fallthru
      _
    // Predicated region
    $region22: #{tpu_custom_call.1} parent=1 // pred_check
      _
    $region23: #{tpu_custom_call.1} parent=1 // pred_check_branch
      %25 = sbr.rel (0) target = $region25
    $region24: #{tpu_custom_call.1} parent=1 // pred_region
      _
    $region25: #{tpu_custom_call.1} parent=1 // pred_fallthru
      _
    // Predicated region
    $region26: #{tpu_custom_call.1} parent=1 // pred_check
      _
    $region27: #{tpu_custom_call.1} parent=1 // pred_check_branch
      %27 = sbr.rel (0) target = $region29
    $region28: #{tpu_custom_call.1} parent=1 // pred_region
      _
    $region29: #{tpu_custom_call.1} parent=1 // pred_fallthru
      _
    // Predicated region
    $region30: #{tpu_custom_call.1} parent=1 // pred_check
      _
    $region31: #{tpu_custom_call.1} parent=1 // pred_check_branch
      %29 = sbr.rel (0) target = $region33
    $region32: #{tpu_custom_call.1} parent=1 // pred_region
      _
    $region33: #{tpu_custom_call.1} parent=1 // pred_fallthru
      _
    %v30 = vld [vmem:[%s0] sm:$0xf]
    %v31 = vld [vmem:[%s0 + $0x4] sm:$0xf]
    %v32 = vld [vmem:[%s0 + $0x8] sm:$0xf]
    %v33 = vld [vmem:[%s0 + $0xc] sm:$0xf]
    %v34 = vmul.f32 %v30, %v30
    %v35 = vmul.f32 %v31, %v31
    %v36 = vmul.f32 %v32, %v32
    %v37 = vmul.f32 %v33, %v33
    %v42 = vcombine.low %v30, %v31
    %v43 = vcombine.low %v32, %v33
    %v45 = vunpack.c.l.s4 1983009808
    %v46 = vunpack.c.0.s8 %v45
    %v47 = vlaneseq
    %v48 = vshrl.u32 %v47, 7
    %v49 = vsub.s32 %v46, %v48
    %v50 = vrot.slane %v42, %v49
    %v52 = vunpack.c.l.s4 1983009808
    %v53 = vunpack.c.0.s8 %v52
    %v54 = vlaneseq
    %v55 = vshrl.u32 %v54, 7
    %v56 = vsub.s32 %v53, %v55
    %v57 = vrot.slane %v43, %v56
    %v58 = vcombine.low %v50, %v57
    %v59 = vcombine.high %v50, %v57
    %v60 = vcombine.low %v59, %v58
    %v61 = vcombine.high %v59, %v58
    %v63 = vunpack.c.l.s4 1983009808
    %v64 = vunpack.c.0.s8 %v63
    %v65 = vlaneseq
    %v66 = vshrl.u32 %v65, 7
    %v67 = vsub.s32 %v64, %v66
    %v68 = vrot.slane %v60, %v67
    %v70 = vunpack.c.l.s4 1983009808
    %v71 = vunpack.c.0.s8 %v70
    %v72 = vlaneseq
    %v73 = vshrl.u32 %v72, 7
    %v74 = vsub.s32 %v71, %v73
    %v75 = vrot.slane %v61, %v74
    %v76 = vcombine.high %v68, %v68
    %v77 = vcombine.high %v75, %v75
    %v82 = vadd.f32 %v30, %v68
    %v83 = vadd.f32 %v31, %v76
    %v84 = vadd.f32 %v32, %v75
    %v85 = vadd.f32 %v33, %v77
    %v90 = vcombine.low %v34, %v35
    %v91 = vcombine.low %v36, %v37
    %v93 = vunpack.c.l.s4 1983009808
    %v94 = vunpack.c.0.s8 %v93
    %v95 = vlaneseq
    %v96 = vshrl.u32 %v95, 7
    %v97 = vsub.s32 %v94, %v96
    %v98 = vrot.slane %v90, %v97
    %v100 = vunpack.c.l.s4 1983009808
    %v101 = vunpack.c.0.s8 %v100
    %v102 = vlaneseq
    %v103 = vshrl.u32 %v102, 7
    %v104 = vsub.s32 %v101, %v103
    %v105 = vrot.slane %v91, %v104
    %v106 = vcombine.low %v98, %v105
    %v107 = vcombine.high %v98, %v105
    %v108 = vcombine.low %v107, %v106
    %v109 = vcombine.high %v107, %v106
    %v111 = vunpack.c.l.s4 1983009808
    %v112 = vunpack.c.0.s8 %v111
    %v113 = vlaneseq
    %v114 = vshrl.u32 %v113, 7
    %v115 = vsub.s32 %v112, %v114
    %v116 = vrot.slane %v108, %v115
    %v118 = vunpack.c.l.s4 1983009808
    %v119 = vunpack.c.0.s8 %v118
    %v120 = vlaneseq
    %v121 = vshrl.u32 %v120, 7
    %v122 = vsub.s32 %v119, %v121
    %v123 = vrot.slane %v109, %v122
    %v124 = vcombine.high %v116, %v116
    %v125 = vcombine.high %v123, %v123
    %v130 = vadd.f32 %v34, %v116
    %v131 = vadd.f32 %v35, %v124
    %v132 = vadd.f32 %v36, %v123
    %v133 = vadd.f32 %v37, %v125
    %v138 = vcombine.low %v82, %v83
    %v139 = vcombine.low %v84, %v85
    %v141 = vunpack.c.l.s4 1983009808
    %v142 = vunpack.c.0.s8 %v141
    %v143 = vlaneseq
    %v144 = vshrl.u32 %v143, 7
    %v145 = vsub.s32 %v142, %v144
    %v146 = vrot.slane %v138, %v145
    %v148 = vunpack.c.l.s4 1983009808
    %v149 = vunpack.c.0.s8 %v148
    %v150 = vlaneseq
    %v151 = vshrl.u32 %v150, 7
    %v152 = vsub.s32 %v149, %v151
    %v153 = vrot.slane %v139, %v152
    %v154 = vcombine.low %v146, %v153
    %v155 = vcombine.high %v146, %v153
    %158 = vrot.lane.b32.xlu0 %v154, 64
    %v159 = vpop.permute.xlu0 %158
    %160 = vrot.lane.b32.xlu0 %v155, 64
    %v161 = vpop.permute.xlu0 %160
    %v162 = vlaneseq
    %v163 = vand.u32 %v162, 127
    %vm164 = vcmp.lt.s32.totalorder %v163, 64
    %v165 = vsel %vm164, %v159, %v161
    %v166 = vsel %vm164, %v161, %v159
    %v169 = vcombine.low %v166, %v165
    %v170 = vcombine.high %v166, %v165
    %v172 = vunpack.c.l.s4 1983009808
    %v173 = vunpack.c.0.s8 %v172
    %v174 = vlaneseq
    %v175 = vshrl.u32 %v174, 7
    %v176 = vsub.s32 %v173, %v175
    %v177 = vrot.slane %v169, %v176
    %v179 = vunpack.c.l.s4 1983009808
    %v180 = vunpack.c.0.s8 %v179
    %v181 = vlaneseq
    %v182 = vshrl.u32 %v181, 7
    %v183 = vsub.s32 %v180, %v182
    %v184 = vrot.slane %v170, %v183
    %v185 = vcombine.high %v177, %v177
    %v186 = vcombine.high %v184, %v184
    %v191 = vadd.f32 %v82, %v177
    %v192 = vadd.f32 %v83, %v185
    %v193 = vadd.f32 %v84, %v184
    %v194 = vadd.f32 %v85, %v186
    %v199 = vcombine.low %v130, %v131
    %v200 = vcombine.low %v132, %v133
    %v202 = vunpack.c.l.s4 1983009808
    %v203 = vunpack.c.0.s8 %v202
    %v204 = vlaneseq
    %v205 = vshrl.u32 %v204, 7
    %v206 = vsub.s32 %v203, %v205
    %v207 = vrot.slane %v199, %v206
    %v209 = vunpack.c.l.s4 1983009808
    %v210 = vunpack.c.0.s8 %v209
    %v211 = vlaneseq
    %v212 = vshrl.u32 %v211, 7
    %v213 = vsub.s32 %v210, %v212
    %v214 = vrot.slane %v200, %v213
    %v215 = vcombine.low %v207, %v214
    %v216 = vcombine.high %v207, %v214
    %219 = vrot.lane.b32.xlu0 %v215, 64
    %v220 = vpop.permute.xlu0 %219
    %221 = vrot.lane.b32.xlu0 %v216, 64
    %v222 = vpop.permute.xlu0 %221
    %v223 = vsel %vm164, %v220, %v222
    %v224 = vsel %vm164, %v222, %v220
    %v227 = vcombine.low %v224, %v223
    %v228 = vcombine.high %v224, %v223
    %v230 = vunpack.c.l.s4 1983009808
    %v231 = vunpack.c.0.s8 %v230
    %v232 = vlaneseq
    %v233 = vshrl.u32 %v232, 7
    %v234 = vsub.s32 %v231, %v233
    %v235 = vrot.slane %v227, %v234
    %v237 = vunpack.c.l.s4 1983009808
    %v238 = vunpack.c.0.s8 %v237
    %v239 = vlaneseq
    %v240 = vshrl.u32 %v239, 7
    %v241 = vsub.s32 %v238, %v240
    %v242 = vrot.slane %v228, %v241
    %v243 = vcombine.high %v235, %v235
    %v244 = vcombine.high %v242, %v242
    %v249 = vadd.f32 %v130, %v235
    %v250 = vadd.f32 %v131, %v243
    %v251 = vadd.f32 %v132, %v242
    %v252 = vadd.f32 %v133, %v244
    %v257 = vcombine.low %v191, %v192
    %v258 = vcombine.low %v193, %v194
    %v260 = vunpack.c.l.s4 1983009808
    %v261 = vunpack.c.0.s8 %v260
    %v262 = vlaneseq
    %v263 = vshrl.u32 %v262, 7
    %v264 = vsub.s32 %v261, %v263
    %v265 = vrot.slane %v257, %v264
    %v267 = vunpack.c.l.s4 1983009808
    %v268 = vunpack.c.0.s8 %v267
    %v269 = vlaneseq
    %v270 = vshrl.u32 %v269, 7
    %v271 = vsub.s32 %v268, %v270
    %v272 = vrot.slane %v258, %v271
    %v273 = vcombine.low %v265, %v272
    %v274 = vcombine.high %v265, %v272
    %277 = vrot.lane.b32.xlu0 %v273, 32
    %v278 = vpop.permute.xlu0 %277
    %279 = vrot.lane.b32.xlu0 %v274, 32
    %v280 = vpop.permute.xlu0 %279
    %vm281 = vcmp.lt.s32.totalorder %v163, 32
    %v282 = vsel %vm281, %v278, %v280
    %v283 = vsel %vm281, %v280, %v278
    %v286 = vcombine.low %v283, %v282
    %v287 = vcombine.high %v283, %v282
    %v289 = vunpack.c.l.s4 1983009808
    %v290 = vunpack.c.0.s8 %v289
    %v291 = vlaneseq
    %v292 = vshrl.u32 %v291, 7
    %v293 = vsub.s32 %v290, %v292
    %v294 = vrot.slane %v286, %v293
    %v296 = vunpack.c.l.s4 1983009808
    %v297 = vunpack.c.0.s8 %v296
    %v298 = vlaneseq
    %v299 = vshrl.u32 %v298, 7
    %v300 = vsub.s32 %v297, %v299
    %v301 = vrot.slane %v287, %v300
    %v302 = vcombine.high %v294, %v294
    %v303 = vcombine.high %v301, %v301
    %v308 = vadd.f32 %v191, %v294
    %v309 = vadd.f32 %v192, %v302
    %v310 = vadd.f32 %v193, %v301
    %v311 = vadd.f32 %v194, %v303
    %v316 = vcombine.low %v249, %v250
    %v317 = vcombine.low %v251, %v252
    %v319 = vunpack.c.l.s4 1983009808
    %v320 = vunpack.c.0.s8 %v319
    %v321 = vlaneseq
    %v322 = vshrl.u32 %v321, 7
    %v323 = vsub.s32 %v320, %v322
    %v324 = vrot.slane %v316, %v323
    %v326 = vunpack.c.l.s4 1983009808
    %v327 = vunpack.c.0.s8 %v326
    %v328 = vlaneseq
    %v329 = vshrl.u32 %v328, 7
    %v330 = vsub.s32 %v327, %v329
    %v331 = vrot.slane %v317, %v330
    %v332 = vcombine.low %v324, %v331
    %v333 = vcombine.high %v324, %v331
    %336 = vrot.lane.b32.xlu0 %v332, 32
    %v337 = vpop.permute.xlu0 %336
    %338 = vrot.lane.b32.xlu0 %v333, 32
    %v339 = vpop.permute.xlu0 %338
    %v340 = vsel %vm281, %v337, %v339
    %v341 = vsel %vm281, %v339, %v337
    %v344 = vcombine.low %v341, %v340
    %v345 = vcombine.high %v341, %v340
    %v347 = vunpack.c.l.s4 1983009808
    %v348 = vunpack.c.0.s8 %v347
    %v349 = vlaneseq
    %v350 = vshrl.u32 %v349, 7
    %v351 = vsub.s32 %v348, %v350
    %v352 = vrot.slane %v344, %v351
    %v354 = vunpack.c.l.s4 1983009808
    %v355 = vunpack.c.0.s8 %v354
    %v356 = vlaneseq
    %v357 = vshrl.u32 %v356, 7
    %v358 = vsub.s32 %v355, %v357
    %v359 = vrot.slane %v345, %v358
    %v360 = vcombine.high %v352, %v352
    %v361 = vcombine.high %v359, %v359
    %v366 = vadd.f32 %v249, %v352
    %v367 = vadd.f32 %v250, %v360
    %v368 = vadd.f32 %v251, %v359
    %v369 = vadd.f32 %v252, %v361
    %v370 = vmul.f32 %v308, 0.125
    %v371 = vmul.f32 %v309, 0.125
    %v372 = vmul.f32 %v310, 0.125
    %v373 = vmul.f32 %v311, 0.125
    %v374 = vmul.f32 %v370, 8.0
    %v375 = vmul.f32 %v371, 8.0
    %v376 = vmul.f32 %v372, 8.0
    %v377 = vmul.f32 %v373, 8.0
    %v378 = vmul.f32 %v374, %v370
    %v379 = vmul.f32 %v375, %v371
    %v380 = vmul.f32 %v376, %v372
    %v381 = vmul.f32 %v377, %v373
    %v382 = vsub.f32 %v366, %v378
    %v383 = vsub.f32 %v367, %v379
    %v384 = vsub.f32 %v368, %v380
    %v385 = vsub.f32 %v369, %v381
    %v386 = vmul.f32 %v382, 0.14285715
    %v387 = vmul.f32 %v383, 0.14285715
    %v388 = vmul.f32 %v384, 0.14285715
    %v389 = vmul.f32 %v385, 0.14285715
    %v390 = vmax.f32 %v386, 0.0
    %v391 = vmax.f32 %v387, 0.0
    %v392 = vmax.f32 %v388, 0.0
    %v393 = vmax.f32 %v389, 0.0
    %v394 = vrsqrt.pop %v390
    %v395 = vmul.f32 %v390, %v394
    %vm396 = vcmp.eq.f32.partialorder %v390, inf
    %v397 = vsel %vm396, %v390, %v395
    %vm398 = vcmp.eq.f32.partialorder %v390, 0.0
    %v399 = vand.u32 %v390, 2147483648
    %v400 = vsel %vm398, %v399, %v397
    %v401 = vrsqrt.pop %v391
    %v402 = vmul.f32 %v391, %v401
    %vm403 = vcmp.eq.f32.partialorder %v391, inf
    %v404 = vsel %vm403, %v391, %v402
    %vm405 = vcmp.eq.f32.partialorder %v391, 0.0
    %v406 = vand.u32 %v391, 2147483648
    %v407 = vsel %vm405, %v406, %v404
    %v408 = vrsqrt.pop %v392
    %v409 = vmul.f32 %v392, %v408
    %vm410 = vcmp.eq.f32.partialorder %v392, inf
    %v411 = vsel %vm410, %v392, %v409
    %vm412 = vcmp.eq.f32.partialorder %v392, 0.0
    %v413 = vand.u32 %v392, 2147483648
    %v414 = vsel %vm412, %v413, %v411
    %v415 = vrsqrt.pop %v393
    %v416 = vmul.f32 %v393, %v415
    %vm417 = vcmp.eq.f32.partialorder %v393, inf
    %v418 = vsel %vm417, %v393, %v416
    %vm419 = vcmp.eq.f32.partialorder %v393, 0.0
    %v420 = vand.u32 %v393, 2147483648
    %v421 = vsel %vm419, %v420, %v418
    %v422 = vld [vmem:[%s1] sm:$0xf]
    %v423 = vld [vmem:[%s1 + $0x4] sm:$0xf]
    %v424 = vld [vmem:[%s1 + $0x8] sm:$0xf]
    %v425 = vld [vmem:[%s1 + $0xc] sm:$0xf]
    %v426 = vmul.f32 %v422, %v422
    %v427 = vmul.f32 %v423, %v423
    %v428 = vmul.f32 %v424, %v424
    %v429 = vmul.f32 %v425, %v425
    %v434 = vcombine.low %v422, %v423
    %v435 = vcombine.low %v424, %v425
    %v437 = vunpack.c.l.s4 1983009808
    %v438 = vunpack.c.0.s8 %v437
    %v439 = vlaneseq
    %v440 = vshrl.u32 %v439, 7
    %v441 = vsub.s32 %v438, %v440
    %v442 = vrot.slane %v434, %v441
    %v444 = vunpack.c.l.s4 1983009808
    %v445 = vunpack.c.0.s8 %v444
    %v446 = vlaneseq
    %v447 = vshrl.u32 %v446, 7
    %v448 = vsub.s32 %v445, %v447
    %v449 = vrot.slane %v435, %v448
    %v450 = vcombine.low %v442, %v449
    %v451 = vcombine.high %v442, %v449
    %v452 = vcombine.low %v451, %v450
    %v453 = vcombine.high %v451, %v450
    %v455 = vunpack.c.l.s4 1983009808
    %v456 = vunpack.c.0.s8 %v455
    %v457 = vlaneseq
    %v458 = vshrl.u32 %v457, 7
    %v459 = vsub.s32 %v456, %v458
    %v460 = vrot.slane %v452, %v459
    %v462 = vunpack.c.l.s4 1983009808
    %v463 = vunpack.c.0.s8 %v462
    %v464 = vlaneseq
    %v465 = vshrl.u32 %v464, 7
    %v466 = vsub.s32 %v463, %v465
    %v467 = vrot.slane %v453, %v466
    %v468 = vcombine.high %v460, %v460
    %v469 = vcombine.high %v467, %v467
    %v474 = vadd.f32 %v422, %v460
    %v475 = vadd.f32 %v423, %v468
    %v476 = vadd.f32 %v424, %v467
    %v477 = vadd.f32 %v425, %v469
    %v482 = vcombine.low %v426, %v427
    %v483 = vcombine.low %v428, %v429
    %v485 = vunpack.c.l.s4 1983009808
    %v486 = vunpack.c.0.s8 %v485
    %v487 = vlaneseq
    %v488 = vshrl.u32 %v487, 7
    %v489 = vsub.s32 %v486, %v488
    %v490 = vrot.slane %v482, %v489
    %v492 = vunpack.c.l.s4 1983009808
    %v493 = vunpack.c.0.s8 %v492
    %v494 = vlaneseq
    %v495 = vshrl.u32 %v494, 7
    %v496 = vsub.s32 %v493, %v495
    %v497 = vrot.slane %v483, %v496
    %v498 = vcombine.low %v490, %v497
    %v499 = vcombine.high %v490, %v497
    %v500 = vcombine.low %v499, %v498
    %v501 = vcombine.high %v499, %v498
    %v503 = vunpack.c.l.s4 1983009808
    %v504 = vunpack.c.0.s8 %v503
    %v505 = vlaneseq
    %v506 = vshrl.u32 %v505, 7
    %v507 = vsub.s32 %v504, %v506
    %v508 = vrot.slane %v500, %v507
    %v510 = vunpack.c.l.s4 1983009808
    %v511 = vunpack.c.0.s8 %v510
    %v512 = vlaneseq
    %v513 = vshrl.u32 %v512, 7
    %v514 = vsub.s32 %v511, %v513
    %v515 = vrot.slane %v501, %v514
    %v516 = vcombine.high %v508, %v508
    %v517 = vcombine.high %v515, %v515
    %v522 = vadd.f32 %v426, %v508
    %v523 = vadd.f32 %v427, %v516
    %v524 = vadd.f32 %v428, %v515
    %v525 = vadd.f32 %v429, %v517
    %v530 = vcombine.low %v474, %v475
    %v531 = vcombine.low %v476, %v477
    %v533 = vunpack.c.l.s4 1983009808
    %v534 = vunpack.c.0.s8 %v533
    %v535 = vlaneseq
    %v536 = vshrl.u32 %v535, 7
    %v537 = vsub.s32 %v534, %v536
    %v538 = vrot.slane %v530, %v537
    %v540 = vunpack.c.l.s4 1983009808
    %v541 = vunpack.c.0.s8 %v540
    %v542 = vlaneseq
    %v543 = vshrl.u32 %v542, 7
    %v544 = vsub.s32 %v541, %v543
    %v545 = vrot.slane %v531, %v544
    %v546 = vcombine.low %v538, %v545
    %v547 = vcombine.high %v538, %v545
    %550 = vrot.lane.b32.xlu0 %v546, 64
    %v551 = vpop.permute.xlu0 %550
    %552 = vrot.lane.b32.xlu0 %v547, 64
    %v553 = vpop.permute.xlu0 %552
    %v554 = vsel %vm164, %v551, %v553
    %v555 = vsel %vm164, %v553, %v551
    %v558 = vcombine.low %v555, %v554
    %v559 = vcombine.high %v555, %v554
    %v561 = vunpack.c.l.s4 1983009808
    %v562 = vunpack.c.0.s8 %v561
    %v563 = vlaneseq
    %v564 = vshrl.u32 %v563, 7
    %v565 = vsub.s32 %v562, %v564
    %v566 = vrot.slane %v558, %v565
    %v568 = vunpack.c.l.s4 1983009808
    %v569 = vunpack.c.0.s8 %v568
    %v570 = vlaneseq
    %v571 = vshrl.u32 %v570, 7
    %v572 = vsub.s32 %v569, %v571
    %v573 = vrot.slane %v559, %v572
    %v574 = vcombine.high %v566, %v566
    %v575 = vcombine.high %v573, %v573
    %v580 = vadd.f32 %v474, %v566
    %v581 = vadd.f32 %v475, %v574
    %v582 = vadd.f32 %v476, %v573
    %v583 = vadd.f32 %v477, %v575
    %v588 = vcombine.low %v522, %v523
    %v589 = vcombine.low %v524, %v525
    %v591 = vunpack.c.l.s4 1983009808
    %v592 = vunpack.c.0.s8 %v591
    %v593 = vlaneseq
    %v594 = vshrl.u32 %v593, 7
    %v595 = vsub.s32 %v592, %v594
    %v596 = vrot.slane %v588, %v595
    %v598 = vunpack.c.l.s4 1983009808
    %v599 = vunpack.c.0.s8 %v598
    %v600 = vlaneseq
    %v601 = vshrl.u32 %v600, 7
    %v602 = vsub.s32 %v599, %v601
    %v603 = vrot.slane %v589, %v602
    %v604 = vcombine.low %v596, %v603
    %v605 = vcombine.high %v596, %v603
    %608 = vrot.lane.b32.xlu0 %v604, 64
    %v609 = vpop.permute.xlu0 %608
    %610 = vrot.lane.b32.xlu0 %v605, 64
    %v611 = vpop.permute.xlu0 %610
    %v612 = vsel %vm164, %v609, %v611
    %v613 = vsel %vm164, %v611, %v609
    %v616 = vcombine.low %v613, %v612
    %v617 = vcombine.high %v613, %v612
    %v619 = vunpack.c.l.s4 1983009808
    %v620 = vunpack.c.0.s8 %v619
    %v621 = vlaneseq
    %v622 = vshrl.u32 %v621, 7
    %v623 = vsub.s32 %v620, %v622
    %v624 = vrot.slane %v616, %v623
    %v626 = vunpack.c.l.s4 1983009808
    %v627 = vunpack.c.0.s8 %v626
    %v628 = vlaneseq
    %v629 = vshrl.u32 %v628, 7
    %v630 = vsub.s32 %v627, %v629
    %v631 = vrot.slane %v617, %v630
    %v632 = vcombine.high %v624, %v624
    %v633 = vcombine.high %v631, %v631
    %v638 = vadd.f32 %v522, %v624
    %v639 = vadd.f32 %v523, %v632
    %v640 = vadd.f32 %v524, %v631
    %v641 = vadd.f32 %v525, %v633
    %v646 = vcombine.low %v580, %v581
    %v647 = vcombine.low %v582, %v583
    %v649 = vunpack.c.l.s4 1983009808
    %v650 = vunpack.c.0.s8 %v649
    %v651 = vlaneseq
    %v652 = vshrl.u32 %v651, 7
    %v653 = vsub.s32 %v650, %v652
    %v654 = vrot.slane %v646, %v653
    %v656 = vunpack.c.l.s4 1983009808
    %v657 = vunpack.c.0.s8 %v656
    %v658 = vlaneseq
    %v659 = vshrl.u32 %v658, 7
    %v660 = vsub.s32 %v657, %v659
    %v661 = vrot.slane %v647, %v660
    %v662 = vcombine.low %v654, %v661
    %v663 = vcombine.high %v654, %v661
    %666 = vrot.lane.b32.xlu0 %v662, 32
    %v667 = vpop.permute.xlu0 %666
    %668 = vrot.lane.b32.xlu0 %v663, 32
    %v669 = vpop.permute.xlu0 %668
    %v670 = vsel %vm281, %v667, %v669
    %v671 = vsel %vm281, %v669, %v667
    %v674 = vcombine.low %v671, %v670
    %v675 = vcombine.high %v671, %v670
    %v677 = vunpack.c.l.s4 1983009808
    %v678 = vunpack.c.0.s8 %v677
    %v679 = vlaneseq
    %v680 = vshrl.u32 %v679, 7
    %v681 = vsub.s32 %v678, %v680
    %v682 = vrot.slane %v674, %v681
    %v684 = vunpack.c.l.s4 1983009808
    %v685 = vunpack.c.0.s8 %v684
    %v686 = vlaneseq
    %v687 = vshrl.u32 %v686, 7
    %v688 = vsub.s32 %v685, %v687
    %v689 = vrot.slane %v675, %v688
    %v690 = vcombine.high %v682, %v682
    %v691 = vcombine.high %v689, %v689
    %v696 = vadd.f32 %v580, %v682
    %v697 = vadd.f32 %v581, %v690
    %v698 = vadd.f32 %v582, %v689
    %v699 = vadd.f32 %v583, %v691
    %v704 = vcombine.low %v638, %v639
    %v705 = vcombine.low %v640, %v641
    %v707 = vunpack.c.l.s4 1983009808
    %v708 = vunpack.c.0.s8 %v707
    %v709 = vlaneseq
    %v710 = vshrl.u32 %v709, 7
    %v711 = vsub.s32 %v708, %v710
    %v712 = vrot.slane %v704, %v711
    %v714 = vunpack.c.l.s4 1983009808
    %v715 = vunpack.c.0.s8 %v714
    %v716 = vlaneseq
    %v717 = vshrl.u32 %v716, 7
    %v718 = vsub.s32 %v715, %v717
    %v719 = vrot.slane %v705, %v718
    %v720 = vcombine.low %v712, %v719
    %v721 = vcombine.high %v712, %v719
    %724 = vrot.lane.b32.xlu0 %v720, 32
    %v725 = vpop.permute.xlu0 %724
    %726 = vrot.lane.b32.xlu0 %v721, 32
    %v727 = vpop.permute.xlu0 %726
    %v728 = vsel %vm281, %v725, %v727
    %v729 = vsel %vm281, %v727, %v725
    %v732 = vcombine.low %v729, %v728
    %v733 = vcombine.high %v729, %v728
    %v735 = vunpack.c.l.s4 1983009808
    %v736 = vunpack.c.0.s8 %v735
    %v737 = vlaneseq
    %v738 = vshrl.u32 %v737, 7
    %v739 = vsub.s32 %v736, %v738
    %v740 = vrot.slane %v732, %v739
    %v742 = vunpack.c.l.s4 1983009808
    %v743 = vunpack.c.0.s8 %v742
    %v744 = vlaneseq
    %v745 = vshrl.u32 %v744, 7
    %v746 = vsub.s32 %v743, %v745
    %v747 = vrot.slane %v733, %v746
    %v748 = vcombine.high %v740, %v740
    %v749 = vcombine.high %v747, %v747
    %v754 = vadd.f32 %v638, %v740
    %v755 = vadd.f32 %v639, %v748
    %v756 = vadd.f32 %v640, %v747
    %v757 = vadd.f32 %v641, %v749
    %v758 = vmul.f32 %v696, 0.125
    %v759 = vmul.f32 %v697, 0.125
    %v760 = vmul.f32 %v698, 0.125
    %v761 = vmul.f32 %v699, 0.125
    %v762 = vmul.f32 %v758, 8.0
    %v763 = vmul.f32 %v759, 8.0
    %v764 = vmul.f32 %v760, 8.0
    %v765 = vmul.f32 %v761, 8.0
    %v766 = vmul.f32 %v762, %v758
    %v767 = vmul.f32 %v763, %v759
    %v768 = vmul.f32 %v764, %v760
    %v769 = vmul.f32 %v765, %v761
    %v770 = vsub.f32 %v754, %v766
    %v771 = vsub.f32 %v755, %v767
    %v772 = vsub.f32 %v756, %v768
    %v773 = vsub.f32 %v757, %v769
    %v774 = vmul.f32 %v770, 0.14285715
    %v775 = vmul.f32 %v771, 0.14285715
    %v776 = vmul.f32 %v772, 0.14285715
    %v777 = vmul.f32 %v773, 0.14285715
    %v778 = vmax.f32 %v774, 0.0
    %v779 = vmax.f32 %v775, 0.0
    %v780 = vmax.f32 %v776, 0.0
    %v781 = vmax.f32 %v777, 0.0
    %v782 = vrsqrt.pop %v778
    %v783 = vmul.f32 %v778, %v782
    %vm784 = vcmp.eq.f32.partialorder %v778, inf
    %v785 = vsel %vm784, %v778, %v783
    %vm786 = vcmp.eq.f32.partialorder %v778, 0.0
    %v787 = vand.u32 %v778, 2147483648
    %v788 = vsel %vm786, %v787, %v785
    %v789 = vrsqrt.pop %v779
    %v790 = vmul.f32 %v779, %v789
    %vm791 = vcmp.eq.f32.partialorder %v779, inf
    %v792 = vsel %vm791, %v779, %v790
    %vm793 = vcmp.eq.f32.partialorder %v779, 0.0
    %v794 = vand.u32 %v779, 2147483648
    %v795 = vsel %vm793, %v794, %v792
    %v796 = vrsqrt.pop %v780
    %v797 = vmul.f32 %v780, %v796
    %vm798 = vcmp.eq.f32.partialorder %v780, inf
    %v799 = vsel %vm798, %v780, %v797
    %vm800 = vcmp.eq.f32.partialorder %v780, 0.0
    %v801 = vand.u32 %v780, 2147483648
    %v802 = vsel %vm800, %v801, %v799
    %v803 = vrsqrt.pop %v781
    %v804 = vmul.f32 %v781, %v803
    %vm805 = vcmp.eq.f32.partialorder %v781, inf
    %v806 = vsel %vm805, %v781, %v804
    %vm807 = vcmp.eq.f32.partialorder %v781, 0.0
    %v808 = vand.u32 %v781, 2147483648
    %v809 = vsel %vm807, %v808, %v806
    %v814 = vcombine.low %v370, %v371
    %v815 = vcombine.low %v372, %v373
    %v817 = vunpack.c.l.s4 1983009808
    %v818 = vunpack.c.0.s8 %v817
    %v819 = vlaneseq
    %v820 = vshrl.u32 %v819, 7
    %v821 = vsub.s32 %v818, %v820
    %v822 = vrot.slane %v814, %v821
    %v824 = vunpack.c.l.s4 1983009808
    %v825 = vunpack.c.0.s8 %v824
    %v826 = vlaneseq
    %v827 = vshrl.u32 %v826, 7
    %v828 = vsub.s32 %v825, %v827
    %v829 = vrot.slane %v815, %v828
    %v830 = vcombine.low %v822, %v829
    %vm832 = vcmask 261120
    %833 = vst.msk [vmem:[#allocation2] sm:$0xff] %vm832, %v830
    %v838 = vcombine.low %v400, %v407
    %v839 = vcombine.low %v414, %v421
    %v841 = vunpack.c.l.s4 1983009808
    %v842 = vunpack.c.0.s8 %v841
    %v843 = vlaneseq
    %v844 = vshrl.u32 %v843, 7
    %v845 = vsub.s32 %v842, %v844
    %v846 = vrot.slane %v838, %v845
    %v848 = vunpack.c.l.s4 1983009808
    %v849 = vunpack.c.0.s8 %v848
    %v850 = vlaneseq
    %v851 = vshrl.u32 %v850, 7
    %v852 = vsub.s32 %v849, %v851
    %v853 = vrot.slane %v839, %v852
    %v854 = vcombine.low %v846, %v853
    %855 = vrot.lane.b32.xlu0 %v854, 32
    %v856 = vpop.permute.xlu0 %855
    %vm858 = vcmask 523520
    %859 = vst.msk [vmem:[#allocation2] sm:$0xff] %vm858, %v856
    %v864 = vcombine.low %v758, %v759
    %v865 = vcombine.low %v760, %v761
    %v867 = vunpack.c.l.s4 1983009808
    %v868 = vunpack.c.0.s8 %v867
    %v869 = vlaneseq
    %v870 = vshrl.u32 %v869, 7
    %v871 = vsub.s32 %v868, %v870
    %v872 = vrot.slane %v864, %v871
    %v874 = vunpack.c.l.s4 1983009808
    %v875 = vunpack.c.0.s8 %v874
    %v876 = vlaneseq
    %v877 = vshrl.u32 %v876, 7
    %v878 = vsub.s32 %v875, %v877
    %v879 = vrot.slane %v865, %v878
    %v880 = vcombine.low %v872, %v879
    %881 = vrot.lane.b32.xlu0 %v880, 64
    %v882 = vpop.permute.xlu0 %881
    %vm884 = vcmask 785920
    %885 = vst.msk [vmem:[#allocation2] sm:$0xff] %vm884, %v882
    %v890 = vcombine.low %v788, %v795
    %v891 = vcombine.low %v802, %v809
    %v893 = vunpack.c.l.s4 1983009808
    %v894 = vunpack.c.0.s8 %v893
    %v895 = vlaneseq
    %v896 = vshrl.u32 %v895, 7
    %v897 = vsub.s32 %v894, %v896
    %v898 = vrot.slane %v890, %v897
    %v900 = vunpack.c.l.s4 1983009808
    %v901 = vunpack.c.0.s8 %v900
    %v902 = vlaneseq
    %v903 = vshrl.u32 %v902, 7
    %v904 = vsub.s32 %v901, %v903
    %v905 = vrot.slane %v891, %v904
    %v906 = vcombine.low %v898, %v905
    %907 = vrot.lane.b32.xlu0 %v906, 96
    %v908 = vpop.permute.xlu0 %907
    %vm910 = vcmask 1048320
    %911 = vst.msk [vmem:[#allocation2] sm:$0xff] %vm910, %v908
    %v912 = vld [vmem:[#allocation2] sm:$0xff]
    %v913 = vld [vmem:[%s2] sm:$0xff]
    %v914 = vld [vmem:[%s2 + $0x8] sm:$0xff]
    %v915 = vld [vmem:[%s2 + $0x10] sm:$0xff]
    %v916 = vld [vmem:[%s2 + $0x18] sm:$0xff]
    %v917 = vld [vmem:[%s2 + $0x20] sm:$0xff]
    %v918 = vld [vmem:[%s2 + $0x28] sm:$0xff]
    %v919 = vld [vmem:[%s2 + $0x30] sm:$0xff]
    %v920 = vld [vmem:[%s2 + $0x38] sm:$0xff]
    %v921 = vld [vmem:[%s2 + $0x40] sm:$0xff]
    %v922 = vld [vmem:[%s2 + $0x48] sm:$0xff]
    %v923 = vld [vmem:[%s2 + $0x50] sm:$0xff]
    %v924 = vld [vmem:[%s2 + $0x58] sm:$0xff]
    %v925 = vld [vmem:[%s2 + $0x60] sm:$0xff]
    %v926 = vld [vmem:[%s2 + $0x68] sm:$0xff]
    %v927 = vld [vmem:[%s2 + $0x70] sm:$0xff]
    %v928 = vld [vmem:[%s2 + $0x78] sm:$0xff]
    %v929 = vld [vmem:[%s3] sm:$0x1]
    %v931 = vlaneseq
    %v932 = vshrl.u32 %v931, 7
    %v933 = vsub.s32 0, %v932
    %v934 = vrot.slane %v929, %v933
    %936 = vmatprep.subr.mxu0 0.0
    %937 = vmatpush1.msra.mxu0 %v928
    %938 = vmatprep.subr.mxu0 0.0
    %939 = vmatpush1.msra.mxu0 %v927
    %940 = vmatprep.subr.mxu0 0.0
    %941 = vmatpush1.msra.mxu0 %v926
    %942 = vmatprep.subr.mxu0 0.0
    %943 = vmatpush1.msra.mxu0 %v925
    %944 = vmatprep.subr.mxu0 0.0
    %945 = vmatpush1.msra.mxu0 %v924
    %946 = vmatprep.subr.mxu0 0.0
    %947 = vmatpush1.msra.mxu0 %v923
    %948 = vmatprep.subr.mxu0 0.0
    %949 = vmatpush1.msra.mxu0 %v922
    %950 = vmatprep.subr.mxu0 0.0
    %951 = vmatpush1.msra.mxu0 %v921
    %952 = vmatprep.subr.mxu0 0.0
    %953 = vmatpush1.msra.mxu0 %v920
    %954 = vmatprep.subr.mxu0 0.0
    %955 = vmatpush1.msra.mxu0 %v919
    %956 = vmatprep.subr.mxu0 0.0
    %957 = vmatpush1.msra.mxu0 %v918
    %958 = vmatprep.subr.mxu0 0.0
    %959 = vmatpush1.msra.mxu0 %v917
    %960 = vmatprep.subr.mxu0 0.0
    %961 = vmatpush1.msra.mxu0 %v916
    %962 = vmatprep.subr.mxu0 0.0
    %963 = vmatpush1.msra.mxu0 %v915
    %964 = vmatprep.subr.mxu0 0.0
    %965 = vmatpush1.msra.mxu0 %v914
    %966 = vmatprep.subr.mxu0 0.0
    %967 = vmatpush1.msra.mxu0 %v913
    %968 = vmatprep.subr.mxu0 0.0
    %969 = vmatpush2.msra.mxu0 0.0
    %970 = vmatprep.subr.mxu0 0.0
    %971 = vmatpush2.msra.mxu0 0.0
    %972 = vmatprep.subr.mxu0 0.0
    %973 = vmatpush2.msra.mxu0 0.0
    %974 = vmatprep.subr.mxu0 0.0
    %975 = vmatpush2.msra.mxu0 0.0
    %976 = vmatprep.subr.mxu0 0.0
    %977 = vmatpush2.msra.mxu0 0.0
    %978 = vmatprep.subr.mxu0 0.0
    %979 = vmatpush2.msra.mxu0 0.0
    %980 = vmatprep.subr.mxu0 0.0
    %981 = vmatpush2.msra.mxu0 0.0
    %982 = vmatprep.subr.mxu0 0.0
    %983 = vmatpush2.msra.mxu0 0.0
    %984 = vmatprep.subr.mxu0 0.0
    %985 = vmatpush2.msra.mxu0 0.0
    %986 = vmatprep.subr.mxu0 0.0
    %987 = vmatpush2.msra.mxu0 0.0
    %988 = vmatprep.subr.mxu0 0.0
    %989 = vmatpush2.msra.mxu0 0.0
    %990 = vmatprep.subr.mxu0 0.0
    %991 = vmatpush2.msra.mxu0 0.0
    %992 = vmatprep.subr.mxu0 0.0
    %993 = vmatpush2.msra.mxu0 0.0
    %994 = vmatprep.subr.mxu0 0.0
    %995 = vmatpush2.msra.mxu0 0.0
    %996 = vmatprep.subr.mxu0 0.0
    %997 = vmatpush2.msra.mxu0 0.0
    %998 = vmatprep.subr.mxu0 0.0
    %999 = vmatpush2.msra.mxu0 0.0
    %1000 = vmatprep.mubr.f32.mxu0 0.0
    %1001 = vmatmul.mubr.f32.gmra.mxu0 %v912
    %v1002 = vpop.f32.mrf.mxu0
    %v1003 = vadd.f32 %v934, %v1002
    %v1004 = vpop.f32.mrf.mxu0
    %1005 = vdwg.mxu0
    %v1006 = vmax.f32 %v1003, 0.0
    %v1007 = vld [vmem:[%s4] sm:$0xff]
    %v1008 = vld [vmem:[%s4 + $0x8] sm:$0xff]
    %v1009 = vld [vmem:[%s4 + $0x10] sm:$0xff]
    %v1010 = vld [vmem:[%s4 + $0x18] sm:$0xff]
    %v1011 = vld [vmem:[%s5] sm:$0x1]
    %v1013 = vlaneseq
    %v1014 = vshrl.u32 %v1013, 7
    %v1015 = vsub.s32 0, %v1014
    %v1016 = vrot.slane %v1011, %v1015
    %v1019 = vsel %vm832, %v1006, 0
    %1021 = vmatprep.subr.mxu0 0.0
    %1022 = vmatpush1.msra.mxu0 0.0
    %1023 = vmatprep.subr.mxu0 0.0
    %1024 = vmatpush1.msra.mxu0 0.0
    %1025 = vmatprep.subr.mxu0 0.0
    %1026 = vmatpush1.msra.mxu0 0.0
    %1027 = vmatprep.subr.mxu0 0.0
    %1028 = vmatpush1.msra.mxu0 0.0
    %1029 = vmatprep.subr.mxu0 0.0
    %1030 = vmatpush1.msra.mxu0 0.0
    %1031 = vmatprep.subr.mxu0 0.0
    %1032 = vmatpush1.msra.mxu0 0.0
    %1033 = vmatprep.subr.mxu0 0.0
    %1034 = vmatpush1.msra.mxu0 0.0
    %1035 = vmatprep.subr.mxu0 0.0
    %1036 = vmatpush1.msra.mxu0 0.0
    %1037 = vmatprep.subr.mxu0 0.0
    %1038 = vmatpush1.msra.mxu0 0.0
    %1039 = vmatprep.subr.mxu0 0.0
    %1040 = vmatpush1.msra.mxu0 0.0
    %1041 = vmatprep.subr.mxu0 0.0
    %1042 = vmatpush1.msra.mxu0 0.0
    %1043 = vmatprep.subr.mxu0 0.0
    %1044 = vmatpush1.msra.mxu0 0.0
    %1045 = vmatprep.subr.mxu0 0.0
    %1046 = vmatpush1.msra.mxu0 %v1010
    %1047 = vmatprep.subr.mxu0 0.0
    %1048 = vmatpush1.msra.mxu0 %v1009
    %1049 = vmatprep.subr.mxu0 0.0
    %1050 = vmatpush1.msra.mxu0 %v1008
    %1051 = vmatprep.subr.mxu0 0.0
    %1052 = vmatpush1.msra.mxu0 %v1007
    %1053 = vmatprep.subr.mxu0 0.0
    %1054 = vmatpush2.msra.mxu0 0.0
    %1055 = vmatprep.subr.mxu0 0.0
    %1056 = vmatpush2.msra.mxu0 0.0
    %1057 = vmatprep.subr.mxu0 0.0
    %1058 = vmatpush2.msra.mxu0 0.0
    %1059 = vmatprep.subr.mxu0 0.0
    %1060 = vmatpush2.msra.mxu0 0.0
    %1061 = vmatprep.subr.mxu0 0.0
    %1062 = vmatpush2.msra.mxu0 0.0
    %1063 = vmatprep.subr.mxu0 0.0
    %1064 = vmatpush2.msra.mxu0 0.0
    %1065 = vmatprep.subr.mxu0 0.0
    %1066 = vmatpush2.msra.mxu0 0.0
    %1067 = vmatprep.subr.mxu0 0.0
    %1068 = vmatpush2.msra.mxu0 0.0
    %1069 = vmatprep.subr.mxu0 0.0
    %1070 = vmatpush2.msra.mxu0 0.0
    %1071 = vmatprep.subr.mxu0 0.0
    %1072 = vmatpush2.msra.mxu0 0.0
    %1073 = vmatprep.subr.mxu0 0.0
    %1074 = vmatpush2.msra.mxu0 0.0
    %1075 = vmatprep.subr.mxu0 0.0
    %1076 = vmatpush2.msra.mxu0 0.0
    %1077 = vmatprep.subr.mxu0 0.0
    %1078 = vmatpush2.msra.mxu0 0.0
    %1079 = vmatprep.subr.mxu0 0.0
    %1080 = vmatpush2.msra.mxu0 0.0
    %1081 = vmatprep.subr.mxu0 0.0
    %1082 = vmatpush2.msra.mxu0 0.0
    %1083 = vmatprep.subr.mxu0 0.0
    %1084 = vmatpush2.msra.mxu0 0.0
    %1085 = vmatprep.mubr.f32.mxu0 0.0
    %1086 = vmatmul.mubr.f32.gmra.mxu0 %v1019
    %v1087 = vpop.f32.mrf.mxu0
    %v1088 = vadd.f32 %v1016, %v1087
    %v1089 = vpop.f32.mrf.mxu0
    %1090 = vdwg.mxu0
    %v1091 = vmax.f32 %v1088, 0.0
    %v1092 = vld [vmem:[%s6] sm:$0x1]
    %v1094 = vlaneseq
    %v1095 = vshrl.u32 %v1094, 7
    %v1096 = vsub.s32 0, %v1095
    %v1097 = vrot.slane %v1092, %v1096
    %v1099 = vmul.f32 %v1091, %v1097
    %vm1100 = vcmask 523264
    %v1101 = vsel %vm1100, %v1099, 0.0
    %1102 = vadd.xlane.f32.xlu0 %v1101
    %v1103 = vpop.xlane.xlu0 %1102
    %s1104 = sld [smem:[#allocation3]]
    %v1105 = vstv %s1104
    %v1106 = vadd.f32 %v1103, %v1105
    %vm1107 = vcmask 7168
    %1108 = vst.msk [vmem:[#allocation4] sm:$0xff] %vm1107, %v1106
    // Predicated region
    $region34: #{tpu_custom_call.1} parent=1 // pred_check
      _
    $region35: #{tpu_custom_call.1} parent=1 // pred_check_branch
      %1110 = sbr.rel (0) target = $region37
    $region36: #{tpu_custom_call.1} parent=1 // pred_region
      // Predicated region
      $region38: #{tpu_custom_call.1} parent=36 // pred_check
        _
      $region39: #{tpu_custom_call.1} parent=36 // pred_check_branch
        %1112 = sbr.rel (0) target = $region41
      $region40: #{tpu_custom_call.1} parent=36 // pred_region
        // Predicated region
        $region42: #{tpu_custom_call.1} parent=40 // pred_check
          _
        $region43: #{tpu_custom_call.1} parent=40 // pred_check_branch
          %1114 = sbr.rel target = $region45
        $region44: #{tpu_custom_call.1} parent=40 // pred_region
          // Predicated region
          $region57: #{tpu_custom_call.1} parent=44 // pred_check
            _
          $region58: #{tpu_custom_call.1} parent=44 // pred_check_branch
            %1130 = sbr.rel (0) target = $region60
          $region59: #{tpu_custom_call.1} parent=44 // pred_region
            %s1132 = ssub.s32 4, 1
            loop: start=0, step=1, limit=1
            $region61: #{tpu_custom_call.1} parent=59 // loop_pre_header
              _
            $region62: #{tpu_custom_call.1} parent=59 // loop_header
              %s1134 = sphi 0, %s1138
              %p1135 = scmp.ge.s32.totalorder %s1134, 1
              %s1139 = sphi [#allocation4], [#allocation4]
              %s1140 = sphi %s8, %s8
            $region63: #{tpu_custom_call.1} parent=59 // loop_header_branch
              %1137 = sbr.rel (%p1135) target = $region67
            $region64: #{tpu_custom_call.1} parent=59 // loop_body
              %v1141 = vld [vmem:[%s1139] sm:%s1132]
              %1142 = vst [vmem:[%s1140] sm:%s1132] %v1141
            $region65: #{tpu_custom_call.1} parent=59 // loop_footer
              %s1138 = sadd.s32 1, %s1134
            $region66: #{tpu_custom_call.1} parent=59 // loop_footer_branch
              %1133 = sbr.rel target = $region62
            $region67: #{tpu_custom_call.1} parent=59 // loop_exit
              _
          $region60: #{tpu_custom_call.1} parent=44 // pred_fallthru
            _
        $region45: #{tpu_custom_call.1} parent=40 // pred_fallthru
          _
        // Predicated region
        $region46: #{tpu_custom_call.1} parent=40 // pred_check
          _
        $region47: #{tpu_custom_call.1} parent=40 // pred_check_branch
          %1116 = sbr.rel (0) target = $region49
        $region48: #{tpu_custom_call.1} parent=40 // pred_region
          %s1118 = ssub.s32 4, 1
          loop: start=0, step=1, limit=1
          $region50: #{tpu_custom_call.1} parent=48 // loop_pre_header
            _
          $region51: #{tpu_custom_call.1} parent=48 // loop_header
            %s1120 = sphi 0, %s1124
            %p1121 = scmp.ge.s32.totalorder %s1120, 1
            %s1125 = sphi [#allocation4], [#allocation4]
            %s1126 = sphi %s8, %s8
          $region52: #{tpu_custom_call.1} parent=48 // loop_header_branch
            %1123 = sbr.rel (%p1121) target = $region56
          $region53: #{tpu_custom_call.1} parent=48 // loop_body
            %v1127 = vld [vmem:[%s1125] sm:%s1118]
            %1128 = vst [vmem:[%s1126] sm:%s1118] %v1127
          $region54: #{tpu_custom_call.1} parent=48 // loop_footer
            %s1124 = sadd.s32 1, %s1120
          $region55: #{tpu_custom_call.1} parent=48 // loop_footer_branch
            %1119 = sbr.rel target = $region51
          $region56: #{tpu_custom_call.1} parent=48 // loop_exit
            _
        $region49: #{tpu_custom_call.1} parent=40 // pred_fallthru
          _
      $region41: #{tpu_custom_call.1} parent=36 // pred_fallthru
        _
      %1143 = vnop
    $region37: #{tpu_custom_call.1} parent=1 // pred_fallthru
      _
    // Predicated region
    $region68: #{tpu_custom_call.1} parent=1 // pred_check
      _
    $region69: #{tpu_custom_call.1} parent=1 // pred_check_branch
      %1145 = sbr.rel (0) target = $region71
    $region70: #{tpu_custom_call.1} parent=1 // pred_region
      _
    $region71: #{tpu_custom_call.1} parent=1 // pred_fallthru
      _

</llo_original>
